<compile_context>
chip_gen: v5e
topology: v5e:2x2
jax: 0.10.0
libtpu: 0.0.40
codegen_flags: <defaults>
</compile_context>

<pallas_src>
import functools

import jax
import jax.numpy as jnp
from jax import lax
from jax.experimental import pallas as pl
from jax.experimental.pallas import tpu as pltpu


def _round_up(x, m):
    return ((x + m - 1) // m) * m


def _wrap_and_clamp(i, n_src):
    """PyTorch-style negative-index wrap plus a defensive clamp."""
    # TODO(synk): PyTorch raises IndexError on out-of-range indices; there is
    # no cheap in-kernel equivalent, so out-of-range indices are clamped.
    i = jnp.where(i < 0, i + n_src, i)
    return jnp.clip(i, 0, n_src - 1)


# ---------------------------------------------------------------------------
# Path 1: preds resident in VMEM (small preds), in-VMEM row gather.
# ---------------------------------------------------------------------------

def _gather_vmem_kernel(idx_ref, preds_ref, out_ref, *, tm, n_src, n_out):
    """Copy tm rows of VMEM-resident preds into the (tm, D) output block."""
    base = pl.program_id(0) * tm

    def body(r, carry):
        # Clamp padded rows of a partial last block to a valid index; Pallas
        # discards the corresponding output rows at writeback.
        g = jnp.minimum(base + r, n_out - 1)
        row = _wrap_and_clamp(idx_ref[g], n_src)
        out_ref[pl.ds(r, 1), :] = preds_ref[pl.ds(row, 1), :]
        return carry

    lax.fori_loop(0, tm, body, 0)


def _gather_rows_vmem(preds, idx, *, tm=None):
    N, D = preds.shape
    M = idx.shape[0]
    row_bytes = D * preds.dtype.itemsize

    if tm is None:
        # ~512 KiB of output per grid step (1 MiB double-buffered).
        tm = max(8, (512 * 1024) // row_bytes)
    tm = max(8, _round_up(int(tm), 8))
    tm = min(tm, _round_up(M, 8))

    kernel = functools.partial(_gather_vmem_kernel, tm=tm, n_src=N, n_out=M)

    grid_spec = pltpu.PrefetchScalarGridSpec(
        num_scalar_prefetch=1,                                     # idx -> SMEM
        grid=(pl.cdiv(M, tm),),
        in_specs=[pl.BlockSpec((N, D), lambda i, idx_ref: (0, 0))],  # resident
        out_specs=pl.BlockSpec((tm, D), lambda i, idx_ref: (i, 0)),
    )

    return pl.pallas_call(
        kernel,
        out_shape=jax.ShapeDtypeStruct((M, D), preds.dtype),
        grid_spec=grid_spec,
        compiler_params=pltpu.CompilerParams(
            dimension_semantics=("parallel",),
        ),
    )(idx, preds)


# ---------------------------------------------------------------------------
# Path 2: large preds — direct HBM->HBM row DMAs with a rolling window.
# ---------------------------------------------------------------------------

_DMA_WINDOW = 8   # in-flight row DMAs per grid step (rolling semaphore pool)


def _gather_hbm_kernel(idx_ref, preds_hbm, out_hbm, sem, *, tm, n_src, n_out,
                       window):
    """preds[idx[base : base+rows]] -> out[base : base+rows], HBM to HBM."""
    base = pl.program_id(0) * tm
    rows = jnp.minimum(n_out - base, tm)     # valid rows in this grid step

    def _row_copy(r):
        # Exact descriptor for row r (used for both start and wait; the SMEM
        # read happens before any .wait() on the same iteration).
        row = _wrap_and_clamp(idx_ref[base + r], n_src)
        return pltpu.make_async_copy(
            preds_hbm.at[pl.ds(row, 1)],       # (1, D) source row in HBM
            out_hbm.at[pl.ds(base + r, 1)],    # (1, D) destination row in HBM
            sem.at[r % window],
        )

    def _start_body(r, carry):
        _row_copy(r).start()
        return carry

    def _wait_body(r, carry):
        _row_copy(r).wait()
        return carry

    def _steady_body(r, carry):
        _row_copy(r - window).wait()           # retire the oldest DMA
        _row_copy(r).start()                   # issue the next one
        return carry

    # Prologue: fill the window (no waits).
    lax.fori_loop(0, jnp.minimum(rows, window), _start_body, 0)
    # Steady state (runs only if rows > window).
    lax.fori_loop(window, rows, _steady_body, 0)
    # Drain the DMAs still in flight.
    lax.fori_loop(jnp.maximum(rows - window, 0), rows, _wait_body, 0)


def _gather_rows_hbm(preds, idx, *, tm=None, window=_DMA_WINDOW):
    N, D = preds.shape
    M = idx.shape[0]
    row_bytes = D * preds.dtype.itemsize

    if tm is None:
        # Target ~1 MiB of gathered data per grid step; no VMEM cost since
        # both source and destination stay in HBM.
        tm = (1 << 20) // row_bytes
    tm = max(8, _round_up(int(tm), 8))
    tm = min(tm, _round_up(M, 8))

    kernel = functools.partial(_gather_hbm_kernel, tm=tm, n_src=N, n_out=M,
                               window=window)

    grid_spec = pltpu.PrefetchScalarGridSpec(
        num_scalar_prefetch=1,                            # idx -> SMEM
        grid=(pl.cdiv(M, tm),),
        in_specs=[pl.BlockSpec(memory_space=pl.ANY)],     # preds stays in HBM
        out_specs=pl.BlockSpec(memory_space=pl.ANY),      # direct HBM output
        scratch_shapes=[pltpu.SemaphoreType.DMA((window,))],
    )

    return pl.pallas_call(
        kernel,
        out_shape=jax.ShapeDtypeStruct((M, D), preds.dtype),
        grid_spec=grid_spec,
        compiler_params=pltpu.CompilerParams(
            # Sequential grid: kernel is HBM-bandwidth bound (both v7x cores
            # share HBM), and it avoids any megacore sharing of the manual
            # DMA semaphore scratch.
            dimension_semantics=("arbitrary",),
        ),
    )(idx, preds)


# ---------------------------------------------------------------------------
# Dispatch wrapper.
# ---------------------------------------------------------------------------

# Below this many gathered bytes, XLA's fused gather beats any kernel launch.
# (On v7x's 3.2 TB/s HBM a larger cutoff, ~4 MiB, would be appropriate.)
_PALLAS_MIN_BYTES = 1 << 20

# Keep preds VMEM-resident only below this size (safe for v7x's 64 MiB/TC;
# v5e/v6e could go to ~24-32 MiB).
_VMEM_RESIDENT_MAX_BYTES = 12 << 20


def identity_forward(preds, seed_idx, idx, *, force_pallas=False,
                     force_hbm=False, tm=None):
    """Pallas equivalent of Identity.forward: returns preds[idx]."""
    del seed_idx  # unused, matching the PyTorch module
    if idx.dtype != jnp.int32:
        idx = idx.astype(jnp.int32)

    N, D = preds.shape
    M = idx.shape[0]
    out_bytes = M * D * preds.dtype.itemsize

    if force_hbm:
        return _gather_rows_hbm(preds, idx, tm=tm)
    if not force_pallas and out_bytes < _PALLAS_MIN_BYTES:
        return preds[idx]          # tiny: fixed launch/step overhead dominates
    if N * D * preds.dtype.itemsize <= _VMEM_RESIDENT_MAX_BYTES:
        return _gather_rows_vmem(preds, idx, tm=tm)
    return _gather_rows_hbm(preds, idx, tm=tm)


if __name__ == "__main__":
    key = jax.random.PRNGKey(0)
    k_preds, k_idx, k_seed = jax.random.split(key, 3)

    # Small but non-trivial: several grid steps + a partial last block.
    N, D, M = 64, 256, 40
    preds = jax.random.normal(k_preds, (N, D), dtype=jnp.float32)
    idx = jax.random.randint(k_idx, (M,), 0, N, dtype=jnp.int32)
    idx = idx.at[3].set(-1)        # PyTorch-style negative index
    seed_idx = jax.random.randint(k_seed, (M,), 0, N, dtype=jnp.int32)  # unused

    ref = preds[idx]

    # VMEM-resident path; tm=16 -> grid of 3 with a partial last block.
    out_v = identity_forward(preds, seed_idx, idx, force_pallas=True, tm=16)
    out_v = jax.block_until_ready(out_v)
    assert out_v.shape == ref.shape and out_v.dtype == ref.dtype
    assert bool(jnp.allclose(out_v, ref)), "VMEM-path gather mismatch vs preds[idx]"

    # Direct HBM->HBM DMA path (forced), same grid layout / partial tail.
    out_h = identity_forward(preds, seed_idx, idx, force_hbm=True, tm=16)
    out_h = jax.block_until_ready(out_h)
    assert out_h.shape == ref.shape and out_h.dtype == ref.dtype
    assert bool(jnp.allclose(out_h, ref)), "HBM-path gather mismatch vs preds[idx]"

    # Size-dispatch wrapper (tiny input -> plain XLA gather fast path).
    out_f = jax.block_until_ready(identity_forward(preds, seed_idx, idx))
    assert bool(jnp.allclose(out_f, ref)), "fallback path mismatch vs preds[idx]"

    print("KERNEL_OK")
</pallas_src>

<mosaic_0001>
module attributes {stable_mosaic.version = 11 : i64} {
  func.func @_gather_vmem_kernel(%arg0: i32, %arg1: memref<40xi32, #tpu.memory_space<smem>>, %arg2: memref<64x256xf32, #tpu.memory_space<vmem>>, %arg3: memref<16x256xf32, #tpu.memory_space<vmem>>) attributes {dimension_semantics = [#tpu.dimension_semantics<parallel>], iteration_bounds = array<i64: 3>, scalar_prefetch = 1 : i64, scratch_operands = 0 : i64, tpu.core_type = #tpu.core_type<tc>, window_params = [{pipeline_mode = #tpu.pipeline_mode<synchronous>, transform_indices = @transform_0, window_bounds = array<i64: 64, 256>}, {transform_indices = @transform_1, window_bounds = array<i64: 16, 256>}]} {
    %c16_i32 = arith.constant 16 : i32
    %0 = arith.muli %arg0, %c16_i32 : i32
    %c0_i32 = arith.constant 0 : i32
    %c16_i32_0 = arith.constant 16 : i32
    %1 = arith.addi %c0_i32, %c16_i32_0 : i32
    %c1_i32 = arith.constant 1 : i32
    scf.for %arg4 = %c0_i32 to %1 step %c1_i32  : i32 {
      %2 = arith.addi %0, %arg4 : i32
      %c39_i32 = arith.constant 39 : i32
      %3 = arith.minsi %2, %c39_i32 : i32
      %4 = arith.index_cast %3 : i32 to index
      %5 = memref.load %arg1[%4] : memref<40xi32, #tpu.memory_space<smem>>
      %c0_i32_2 = arith.constant 0 : i32
      %6 = arith.cmpi slt, %5, %c0_i32_2 : i32
      %c64_i32 = arith.constant 64 : i32
      %7 = arith.addi %5, %c64_i32 : i32
      %8 = arith.select %6, %7, %5 : i32
      %c0_i32_3 = arith.constant 0 : i32
      %c63_i32 = arith.constant 63 : i32
      %9 = arith.maxsi %c0_i32_3, %8 : i32
      %10 = arith.minsi %c63_i32, %9 : i32
      %11 = arith.index_cast %10 : i32 to index
      %c0 = arith.constant 0 : index
      %12 = vector.load %arg2[%11, %c0] : memref<64x256xf32, #tpu.memory_space<vmem>>, vector<1x256xf32>
      %13 = arith.index_cast %arg4 : i32 to index
      %c0_4 = arith.constant 0 : index
      %14 = vector.load %arg3[%13, %c0_4] : memref<16x256xf32, #tpu.memory_space<vmem>>, vector<1x256xf32>
      tpu.vector_store %arg3[%13, %c0_4], %12 {strides = array<i32>} : memref<16x256xf32, #tpu.memory_space<vmem>>, vector<1x256xf32>,
    }
    %c16_i32_1 = arith.constant 16 : i32
    return
  }
  func.func @transform_0(%arg0: i32, %arg1: memref<40xi32, #tpu.memory_space<smem>>) -> (i32, i32) {
    %c0_i32 = arith.constant 0 : i32
    %c0_i32_0 = arith.constant 0 : i32
    %c0_i32_1 = arith.constant 0 : i32
    return %c0_i32, %c0_i32_0 : i32, i32
  }
  func.func @transform_1(%arg0: i32, %arg1: memref<40xi32, #tpu.memory_space<smem>>) -> (i32, i32) {
    %c0_i32 = arith.constant 0 : i32
    %c0_i32_0 = arith.constant 0 : i32
    return %arg0, %c0_i32 : i32, i32
  }
}

</mosaic_0001>

<llo_original>
// kernel: tpu_custom_call.1
$region0: #{tpu_custom_call.1}
  #allocation0 [shape = 'u32[]', space=smem, size = 0x4, offset = 0x4, fixed_abs, tag = 'smem constant byte address 0x4 - core index']
  #allocation1 [shape = 'u32[72,128]{1,0:T(1,128)}', space=vmem, size = 0x9000, scoped, tag = 'internal scratch']
  #allocation2 [shape = 's32[1]{0}', space=sflag, size = 0x4, scoped, tag = 'scoped memory for tpu_custom_call.1']
  #allocation3 [shape = 'u8[512]{0}', space=smem, size = 0x200, scoped, tag = 'prefetched SMEM operand 0']
  %s0 = inlined_call_operand.hbm [shape: s32[40], index: 0, kind: input, shape index: {}]
  %s1 = inlined_call_operand.hbm [shape: f32[64,256], index: 1, kind: input, shape index: {}]
  %s2 = inlined_call_operand.hbm [shape: f32[40,256], index: 2, kind: output, shape index: {}]
  %s3 = sld [smem:[#allocation0]]
  $region48: #{tpu_custom_call.1} parent=0
    _
  %s5 = ssub.s32 1, %s3
  %s6 = scalar_select 0, %s5, %s3
  %s8 = sshll.u32 %s0, 4
  %s9 = int_to_ptr.hbm [resolvable:$true] %s8
  %11 = dma.hbm_to_smem %s9, 16, [#allocation3], [#allocation2]
  %13 = dma.done [#allocation2], 16
  %14 = sfence
  $region1: #{tpu_custom_call.1} parent=0
    #allocation4 [shape = 'u8[65536]{0}', space=vmem, size = 0x10000, scoped, tag = 'input window, operand 1, single buffered']
    #allocation5 [shape = 's32[2]{0}', space=sflag, size = 0x8, scoped, tag = 'scoped memory for tpu_custom_call.1']
    #allocation6 [shape = 's32[2]{0}', space=sflag, size = 0x8, scoped, tag = 'scoped memory for tpu_custom_call.1']
    #allocation7 [shape = 'u8[32768]{0}', space=vmem, size = 0x8000, scoped, tag = 'output window, operand 0']
    %15 = vsyncpa [#allocation5], 0
    %16 = vsyncpa [#allocation6], 0
    %s17 = scalar_lea.sflag [#allocation6], 1
    %18 = vsyncpa %s17, 0
    loop: start=0, step=1, limit=5
    $region2: #{tpu_custom_call.1} parent=1 // loop_pre_header
      _
    $region3: #{tpu_custom_call.1} parent=1 // loop_header
      %s20 = sphi 0, %s24
      %p21 = scmp.ge.s32.totalorder %s20, 5
      %s28 = sphi 0, %s28
      %s30 = sphi 0, %s28
      %s31 = sphi 0, %s30
      %s45 = sphi 0, %s31
      %s51 = sphi 0, %s53
      %s54 = sphi 0, %s51
      %s55 = sphi 0, %s54
      %s71 = sphi 0, %s55
    $region4: #{tpu_custom_call.1} parent=1 // loop_header_branch
      %23 = sbr.rel (%p21) target = $region8
    $region5: #{tpu_custom_call.1} parent=1 // loop_body
      %s25 = ssub.s32 %s20, 1
      %s26 = ssub.s32 %s20, 2
      %s27 = sadd.s32 %s20, 1
      %s29 = sadd.s32 %s28, 1
      %p32 = scmp.eq.s32.totalorder %s20, 2
      %p33 = scmp.ne.s32.totalorder %s28, %s30
      %p34 = scmp.eq.s32.totalorder %s20, 0
      %p35 = por %p33, %p34
      %p36 = scmp.ne.s32.totalorder %s28, %s30
      %p37 = scmp.eq.s32.totalorder %s25, 2
      %p38 = por %p36, %p37
      %p39 = scmp.ne.s32.totalorder %s30, %s31
      %p40 = scmp.eq.s32.totalorder %s25, 0
      %p41 = por %p39, %p40
      %p42 = scmp.ne.s32.totalorder %s30, %s31
      %p43 = scmp.eq.s32.totalorder %s26, 2
      %p44 = por %p42, %p43
      %p46 = scmp.ne.s32.totalorder %s31, %s45
      %p47 = scmp.eq.s32.totalorder %s26, 0
      %p48 = por %p46, %p47
      %s49 = ssub.s32 %s20, %s27
      %p50 = scmp.eq.s32.totalorder %s49, 0
      %s52 = sadd.s32 %s51, 1
      %s53 = scalar_select %p50, %s51, %s52
      %p56 = pneg %p50
      %p57 = scmp.eq.s32.totalorder %s20, 2
      %p58 = por %p56, %p57
      %p59 = scmp.ne.s32.totalorder %s51, %s54
      %p60 = scmp.eq.s32.totalorder %s20, 0
      %p61 = por %p59, %p60
      %p62 = scmp.ne.s32.totalorder %s51, %s54
      %p63 = scmp.eq.s32.totalorder %s25, 2
      %p64 = por %p62, %p63
      %p65 = scmp.ne.s32.totalorder %s54, %s55
      %p66 = scmp.eq.s32.totalorder %s25, 0
      %p67 = por %p65, %p66
      %p68 = scmp.ne.s32.totalorder %s54, %s55
      %p69 = scmp.eq.s32.totalorder %s26, 2
      %p70 = por %p68, %p69
      %p72 = scmp.ne.s32.totalorder %s55, %s71
      %p73 = scmp.eq.s32.totalorder %s26, 0
      %p74 = por %p72, %p73
      %p75 = scmp.le.s32.totalorder 1, %s20
      %p76 = scmp.lt.s32.totalorder %s20, 4
      %p77 = pnand %p75, %p76
      %p78 = pneg %p77
      // Predicated region
      $region9: #{tpu_custom_call.1} parent=5 // pred_check
        _
      $region10: #{tpu_custom_call.1} parent=5 // pred_check_branch
        %80 = sbr.rel (%p77) target = $region12
      $region11: #{tpu_custom_call.1} parent=5 // pred_region
        %s81 = ssub.s32 %s20, 1
        // Predicated region
        $region13: #{tpu_custom_call.1} parent=11 // pred_check
          %p82 = pneg %p41
        $region14: #{tpu_custom_call.1} parent=11 // pred_check_branch
          %84 = sbr.rel (%p82) target = $region16
        $region15: #{tpu_custom_call.1} parent=11 // pred_region
          %86 = vsyncadd [#allocation5], 0
          %s87 = sshll.u32 %s1, 4
          %s88 = int_to_ptr.hbm [resolvable:$true] %s87
          %s89 = sshll.u32 [#allocation4], 4
          %s90 = int_to_ptr.vmem [resolvable:$true] %s89
          %95 = dma.hbm_to_vmem [thread:$0]  %s88, 2048, %s90, [#allocation5], 256, 256, 16
        $region16: #{tpu_custom_call.1} parent=11 // pred_fallthru
          _
      $region12: #{tpu_custom_call.1} parent=5 // pred_fallthru
        _
      %p96 = scmp.lt.s32.totalorder %s20, 3
      // Predicated region
      $region17: #{tpu_custom_call.1} parent=5 // pred_check
        %p97 = pneg %p96
      $region18: #{tpu_custom_call.1} parent=5 // pred_check_branch
        %99 = sbr.rel (%p97) target = $region20
      $region19: #{tpu_custom_call.1} parent=5 // pred_region
        _
      $region20: #{tpu_custom_call.1} parent=5 // pred_fallthru
        _
      %p100 = scmp.le.s32.totalorder 1, %s20
      %p101 = scmp.lt.s32.totalorder %s20, 4
      %p102 = pnand %p100, %p101
      %p103 = pneg %p102
      // Predicated region
      $region21: #{tpu_custom_call.1} parent=5 // pred_check
        _
      $region22: #{tpu_custom_call.1} parent=5 // pred_check_branch
        %105 = sbr.rel (%p102) target = $region24
      $region23: #{tpu_custom_call.1} parent=5 // pred_region
        %s106 = ssub.s32 %s20, 1
        // Predicated region
        $region25: #{tpu_custom_call.1} parent=23 // pred_check
          %p107 = pneg %p41
        $region26: #{tpu_custom_call.1} parent=23 // pred_check_branch
          %109 = sbr.rel (%p107) target = $region28
        $region27: #{tpu_custom_call.1} parent=23 // pred_region
          %111 = dma.done [#allocation5], 2048
        $region28: #{tpu_custom_call.1} parent=23 // pred_fallthru
          _
        %p112 = pneg %p41
        %p113 = pneg %p38
        %p114 = pneg %p67
        %p115 = pneg %p64
        %s116 = sand.u32 %s54, 1
        %s117 = scalar_lea.sflag [#allocation6], %s116
        %s118 = sand.u32 %s54, 1
        %s119 = smul.addr %s118, 32
        %s120 = scalar_lea.vmem [#allocation7], %s119
        %s121 = smul.u32 2, %s25
        %s122 = ssub.s32 5, %s121
        %p123 = scmp.lt.s32.totalorder %s122, 2
        %s124 = scalar_select %p123, %s122, 2
        %s125 = smul.u32 8, %s124
        %s126 = smul.u32 %s125, 2
        %s127 = smul.u32 %s25, 16
        loop: start=0, step=1, limit=16
        $region29: #{tpu_custom_call.1} parent=23 // loop_pre_header
          _
        $region30: #{tpu_custom_call.1} parent=23 // loop_header
          %s129 = sphi 0, %s133
          %p130 = scmp.ge.s32.totalorder %s129, 16
        $region31: #{tpu_custom_call.1} parent=23 // loop_header_branch
          %132 = sbr.rel (%p130) target = $region35
        $region32: #{tpu_custom_call.1} parent=23 // loop_body
          %s134 = sadd.s32 %s127, %s129
          %p135 = scmp.lt.s32.totalorder %s134, 39
          %s136 = scalar_select %p135, %s134, 39
          %s137 = sld [smem:[#allocation3 + %s136]]
          %p138 = scmp.lt.s32.totalorder %s137, 0
          %s139 = sadd.s32 %s137, 64
          %s140 = scalar_select %p138, %s139, %s137
          %p141 = scmp.gt.s32.totalorder %s140, 0
          %s142 = scalar_select %p141, %s140, 0
          %p143 = scmp.lt.s32.totalorder %s142, 63
          %s144 = scalar_select %p143, %s142, 63
          %s145 = sshra.s32 %s144, 3
          %s146 = sand.u32 %s144, 7
          %s147 = sshra.s32 %s144, 3
          %s148 = sand.u32 %s144, 7
          %s149 = smul.u32 %s145, 2
          %s150 = smul.u32 %s149, 8
          %s151 = sadd.s32 %s150, %s148
          %s152 = scalar_lea.vmem [#allocation4], %s151
          %v153 = vld [vmem:[%s152] ss:$8 sm:$0x3]
          %v154 = vlaneseq
          %vm155 = vcmp.ge.s32.totalorder %v154, 0
          %vm156 = vcmp.lt.s32.totalorder %v154, 256
          %vm157 = vmand %vm155, %vm156
          %s158 = sshra.s32 %s129, 3
          %s159 = sand.u32 %s129, 7
          %s160 = sshra.s32 %s129, 3
          %s161 = sand.u32 %s129, 7
          %s162 = smul.u32 %s158, 2
          %s163 = smul.u32 %s162, 8
          %s164 = sadd.s32 %s163, %s161
          %s165 = scalar_lea.vmem %s120, %s164 [#allocation7]
          %166 = vst.msk [vmem:[%s165] ss:$8 sm:$0x3] %vm157, %v153
          %167 = vst.msk [vmem:[%s165] ss:$8 sm:$0x0] %vm157, %v153
        $region33: #{tpu_custom_call.1} parent=23 // loop_footer
          %s133 = sadd.s32 1, %s129
        $region34: #{tpu_custom_call.1} parent=23 // loop_footer_branch
          %128 = sbr.rel target = $region30
        $region35: #{tpu_custom_call.1} parent=23 // loop_exit
          _
        %s168 = sand.u32 %s54, 1
        %s169 = scalar_lea.sflag [#allocation6], %s168
        %s170 = sand.u32 %s54, 1
        %s171 = smul.addr %s170, 32
        %s172 = scalar_lea.vmem [#allocation7], %s171
        // Predicated region
        $region36: #{tpu_custom_call.1} parent=23 // pred_check
          %p173 = pneg %p64
        $region37: #{tpu_custom_call.1} parent=23 // pred_check_branch
          %175 = sbr.rel (%p173) target = $region39
        $region38: #{tpu_custom_call.1} parent=23 // pred_region
          %s176 = smul.u32 2, %s25
          %s177 = ssub.s32 5, %s176
          %p178 = scmp.lt.s32.totalorder %s177, 2
          %s179 = scalar_select %p178, %s177, 2
          %s180 = smul.u32 8, %s179
          %s181 = smul.u32 %s180, 2
          %s182 = ssub.s32 32, %s181
          %s183 = sshll.u32 %s182, 4
          %184 = vsyncadd %s169, %s183
          %p185 = scmp.ne.s32.totalorder 0, %s181
          %s186 = smul.addr %s176, 2
          %s187 = smul.addr %s186, 8
          %s188 = scalar_lea.hbm %s2, %s187
          %s189 = smul.u32 16, %s179
          %s190 = sshll.u32 %s172, 4
          %s191 = int_to_ptr.vmem [resolvable:$true] %s190
          %s192 = sshll.u32 %s188, 4
          %s193 = int_to_ptr.hbm [resolvable:$true] %s192
          %s194 = sshll.u32 %s189, 4
          %198 = dma.vmem_to_hbm [thread:$0]  (%p185), %s191, %s194, %s193, %s169, 256, 256, 16
        $region39: #{tpu_custom_call.1} parent=23 // pred_fallthru
          _
      $region24: #{tpu_custom_call.1} parent=5 // pred_fallthru
        _
      %p199 = scmp.le.s32.totalorder 2, %s20
      // Predicated region
      $region40: #{tpu_custom_call.1} parent=5 // pred_check
        %p200 = pneg %p199
      $region41: #{tpu_custom_call.1} parent=5 // pred_check_branch
        %202 = sbr.rel (%p200) target = $region43
      $region42: #{tpu_custom_call.1} parent=5 // pred_region
        %s203 = ssub.s32 %s20, 2
        // Predicated region
        $region44: #{tpu_custom_call.1} parent=42 // pred_check
          %p204 = pneg %p70
        $region45: #{tpu_custom_call.1} parent=42 // pred_check_branch
          %206 = sbr.rel (%p204) target = $region47
        $region46: #{tpu_custom_call.1} parent=42 // pred_region
          %s207 = sand.u32 %s55, 1
          %s208 = scalar_lea.sflag [#allocation6], %s207
          %s209 = sand.u32 %s55, 1
          %s210 = smul.addr %s209, 32
          %s211 = scalar_lea.vmem [#allocation7], %s210
          %213 = dma.done %s208, 512
        $region47: #{tpu_custom_call.1} parent=42 // pred_fallthru
          _
      $region43: #{tpu_custom_call.1} parent=5 // pred_fallthru
        _
    $region6: #{tpu_custom_call.1} parent=1 // loop_footer
      %s24 = sadd.s32 1, %s20
    $region7: #{tpu_custom_call.1} parent=1 // loop_footer_branch
      %19 = sbr.rel target = $region3
    $region8: #{tpu_custom_call.1} parent=1 // loop_exit
      _
    %214 = vsyncpa [#allocation5], 1
    %s215 = scalar_lea.sflag [#allocation5], 1
    %216 = vsyncpa %s215, 1
    %217 = vsyncpa [#allocation6], 1
    %s218 = scalar_lea.sflag [#allocation6], 1
    %219 = vsyncpa %s218, 1

</llo_original>
